<compile_context>
chip_gen: v7x
topology: tpu7x:2x2x1
jax: 0.10.0
libtpu: 0.0.40
codegen_flags: <defaults>
</compile_context>

<pallas_src>
import jax
import jax.numpy as jnp
from jax.experimental import pallas as pl
from jax.experimental.pallas import tpu as pltpu


def _residual_double_kernel(x_ref, o_ref):
    # blocks(x) + shortcut(x), both Identity -> x + x
    o_ref[...] = x_ref[...] + x_ref[...]


def _sublane_multiple(dtype):
    # Packed-sublane multiple: f32 -> 8, bf16/f16 -> 16, int8/fp8 -> 32.
    itemsize = jnp.dtype(dtype).itemsize
    return max(8, 32 // max(1, itemsize))


def _choose_lanes(total, sublane_mult):
    # Widest lane width (capped at 2048; store benefit saturates well before
    # that) that still leaves at least one full group of sublanes worth of rows.
    for lanes in (2048, 1024, 512, 256, 128):
        if total >= lanes * sublane_mult:
            return lanes
    return 128


def _tiling_budget():
    """Generation-aware (tile_bytes, vmem_limit_bytes)."""
    vmem = None
    try:
        info = pltpu.get_tpu_info()
        vmem = getattr(info, "vmem_capacity_bytes", None)
    except Exception:
        vmem = None
    if vmem is not None and vmem >= 96 * 1024 * 1024:
        # v5e / v6e: 128 MiB physical VMEM -> bigger tiles, generous limit.
        return 12 * 1024 * 1024, 96 * 1024 * 1024
    # v7x (64 MiB physical VMEM) or unknown: conservative but ample everywhere.
    return 8 * 1024 * 1024, 48 * 1024 * 1024


def residual_block_forward(x, in_channels, out_channels, *, donate_input=False):
    """Pallas implementation of ResidualBlock.forward.

    blocks and shortcut are nn.Identity, so forward(x) == x + x regardless of
    whether the shortcut path is taken (in_channels != out_channels). The
    channel args are kept for API parity only.
    """
    del in_channels, out_channels

    orig_shape = x.shape
    total = int(x.size)
    itemsize = jnp.dtype(x.dtype).itemsize
    sub = _sublane_multiple(x.dtype)
    lanes = _choose_lanes(total, sub)
    tile_bytes, vmem_limit = _tiling_budget()

    # Rows needed to cover the flattened array, rounded up to the packed
    # sublane multiple so every vreg is full and stores stay unmasked.
    rows_needed = -(-total // lanes)
    rows_needed = -(-rows_needed // sub) * sub

    # Rows per tile: large tiles amortize the ~0.35us per-grid-step overhead.
    max_rows = max(sub, (tile_bytes // (lanes * itemsize)) // sub * sub)

    num_blocks = -(-rows_needed // max_rows)
    array_bytes = total * itemsize
    if array_bytes > (1 << 20) and num_blocks < 2:
        num_blocks = 2          # engage both v7x TCs + DMA pipelining
    if num_blocks > 1 and num_blocks % 2:
        num_blocks += 1         # even grid shards cleanly across 2 TCs

    block_rows = -(-rows_needed // num_blocks)
    block_rows = -(-block_rows // sub) * sub
    rows = num_blocks * block_rows
    total_padded = rows * lanes

    xf = x.reshape(-1)
    if total_padded != total:
        xf = jnp.pad(xf, (0, total_padded - total))
    xb = xf.reshape(rows, lanes)

    out = pl.pallas_call(
        _residual_double_kernel,
        out_shape=jax.ShapeDtypeStruct((rows, lanes), x.dtype),
        grid=(num_blocks,),
        in_specs=[pl.BlockSpec((block_rows, lanes), lambda i: (i, 0))],
        out_specs=pl.BlockSpec((block_rows, lanes), lambda i: (i, 0)),
        compiler_params=pltpu.CompilerParams(
            dimension_semantics=("parallel",),   # shards across v7x's 2 TCs
            vmem_limit_bytes=vmem_limit,
        ),
        cost_estimate=pl.CostEstimate(
            flops=total_padded,
            transcendentals=0,
            bytes_accessed=2 * total_padded * itemsize,
        ),
        input_output_aliases={0: 0} if donate_input else {},
    )(xb)

    out = out.reshape(-1)
    if total_padded != total:
        out = out[:total]
    return out.reshape(orig_shape)


if __name__ == "__main__":
    key = jax.random.PRNGKey(0)
    N, C, H, W = 2, 4, 16, 16
    x = jax.random.normal(key, (N, C, H, W), dtype=jnp.float32)

    # ResidualBlock(in_channels=4, out_channels=8): should_apply_shortcut=True,
    # but the shortcut is Identity, so the math is identical either way.
    in_channels, out_channels = 4, 8

    y = residual_block_forward(x, in_channels, out_channels)
    y = jax.block_until_ready(y)

    # Reference: forward(x) == x + x
    ref = x + x
    assert y.shape == x.shape and y.dtype == x.dtype
    assert jnp.allclose(y, ref, atol=0, rtol=0), "mismatch vs reference"

    print("KERNEL_OK")
</pallas_src>

<mosaic_0001>
module attributes {stable_mosaic.version = 11 : i64} {
  func.func @_residual_double_kernel(%arg0: i32, %arg1: memref<8x256xf32, #tpu.memory_space<vmem>>, %arg2: memref<8x256xf32, #tpu.memory_space<vmem>>) attributes {dimension_semantics = [#tpu.dimension_semantics<parallel>], iteration_bounds = array<i64: 1>, scalar_prefetch = 0 : i64, scratch_operands = 0 : i64, tpu.core_type = #tpu.core_type<tc>, window_params = [{transform_indices = @transform_0, window_bounds = array<i64: 8, 256>}, {transform_indices = @transform_1, window_bounds = array<i64: 8, 256>}]} {
    %c0 = arith.constant 0 : index
    %c0_0 = arith.constant 0 : index
    %0 = vector.load %arg1[%c0, %c0_0] : memref<8x256xf32, #tpu.memory_space<vmem>>, vector<8x256xf32>
    %c0_1 = arith.constant 0 : index
    %c0_2 = arith.constant 0 : index
    %1 = vector.load %arg1[%c0_1, %c0_2] : memref<8x256xf32, #tpu.memory_space<vmem>>, vector<8x256xf32>
    %2 = arith.addf %0, %1 : vector<8x256xf32>
    %c0_3 = arith.constant 0 : index
    %c0_4 = arith.constant 0 : index
    %3 = vector.load %arg2[%c0_3, %c0_4] : memref<8x256xf32, #tpu.memory_space<vmem>>, vector<8x256xf32>
    tpu.vector_store %arg2[%c0_3, %c0_4], %2 {strides = array<i32>} : memref<8x256xf32, #tpu.memory_space<vmem>>, vector<8x256xf32>,
    return
  }
  func.func @transform_0(%arg0: i32) -> (i32, i32) {
    %c0_i32 = arith.constant 0 : i32
    %c0_i32_0 = arith.constant 0 : i32
    return %arg0, %c0_i32 : i32, i32
  }
  func.func @transform_1(%arg0: i32) -> (i32, i32) {
    %c0_i32 = arith.constant 0 : i32
    %c0_i32_0 = arith.constant 0 : i32
    return %arg0, %c0_i32 : i32, i32
  }
}

</mosaic_0001>

<llo_original>
// kernel: tpu_custom_call.1
$region0: #{tpu_custom_call.1}
  #allocation0 [shape = 'u32[]', space=smem, size = 0x4, offset = 0x4, fixed_abs, tag = 'smem constant byte address 0x4 - core index']
  #allocation1 [shape = 'u32[144,128]{1,0:T(1,128)}', space=vmem, size = 0x12000, scoped, tag = 'internal scratch']
  %s0 = inlined_call_operand.hbm [shape: f32[8,256], index: 0, kind: input, shape index: {}]
  %s1 = inlined_call_operand.hbm [shape: f32[8,256], index: 1, kind: output, shape index: {}]
  %s2 = sld [smem:[#allocation0]]
  $region18: #{tpu_custom_call.1} parent=0
    _
  %s4 = ssub.s32 1, %s2
  %s5 = scalar_select 0, %s4, %s2
  $region1: #{tpu_custom_call.1} parent=0
    #allocation2 [shape = 'u8[8192]{0}', space=vmem, size = 0x2000, scoped, tag = 'input window, operand 0, single buffered']
    #allocation3 [shape = 's32[1]{0}', space=sflag, size = 0x4, scoped, tag = 'scoped memory for tpu_custom_call.1']
    #allocation4 [shape = 's32[1]{0}', space=sflag, size = 0x4, scoped, tag = 'scoped memory for tpu_custom_call.1']
    #allocation5 [shape = 'u8[8192]{0}', space=vmem, size = 0x2000, scoped, tag = 'output window, operand 0, single buffered']
    %6 = vsyncpa [#allocation3], 0
    %7 = vsyncpa [#allocation4], 0
    // Predicated region
    $region2: #{tpu_custom_call.1} parent=1 // pred_check
      _
    $region3: #{tpu_custom_call.1} parent=1 // pred_check_branch
      %9 = sbr.rel (0) target = $region5
    $region4: #{tpu_custom_call.1} parent=1 // pred_region
      %s11 = ssub.s32 256, 256
      %12 = vsyncadd [#allocation3], %s11
      %s14 = sshll.u32 [#allocation2], 4
      %s15 = int_to_ptr.vmem [resolvable:$true] %s14
      %17 = dma.hbm_to_vmem [thread:$0]  %s0, 256, %s15, [#allocation3]
    $region5: #{tpu_custom_call.1} parent=1 // pred_fallthru
      _
    // Predicated region
    $region6: #{tpu_custom_call.1} parent=1 // pred_check
      _
    $region7: #{tpu_custom_call.1} parent=1 // pred_check_branch
      %19 = sbr.rel (0) target = $region9
    $region8: #{tpu_custom_call.1} parent=1 // pred_region
      %20 = dma.done [#allocation3], 256
    $region9: #{tpu_custom_call.1} parent=1 // pred_fallthru
      _
    %v21 = vld [vmem:[#allocation2] sm:$0xff]
    %v22 = vld [vmem:[#allocation2 + $0x8] sm:$0xff]
    %v23 = vadd.f32 %v21, %v21
    %v24 = vadd.f32 %v22, %v22
    %25 = vst [vmem:[#allocation5] sm:$0xff] %v23
    %26 = vst [vmem:[#allocation5 + $0x8] sm:$0xff] %v24
    // Predicated region
    $region10: #{tpu_custom_call.1} parent=1 // pred_check
      _
    $region11: #{tpu_custom_call.1} parent=1 // pred_check_branch
      %28 = sbr.rel (0) target = $region13
    $region12: #{tpu_custom_call.1} parent=1 // pred_region
      %s30 = ssub.s32 256, 256
      %31 = vsyncadd [#allocation4], %s30
      %s33 = sshll.u32 [#allocation5], 4
      %s34 = int_to_ptr.vmem [resolvable:$true] %s33
      %36 = dma.vmem_to_hbm [thread:$0]  %s34, 256, %s1, [#allocation4]
    $region13: #{tpu_custom_call.1} parent=1 // pred_fallthru
      _
    // Predicated region
    $region14: #{tpu_custom_call.1} parent=1 // pred_check
      _
    $region15: #{tpu_custom_call.1} parent=1 // pred_check_branch
      %38 = sbr.rel (0) target = $region17
    $region16: #{tpu_custom_call.1} parent=1 // pred_region
      %39 = dma.done [#allocation4], 256
    $region17: #{tpu_custom_call.1} parent=1 // pred_fallthru
      _
    %40 = vsyncpa [#allocation3], 1
    %41 = vsyncpa [#allocation4], 1

</llo_original>
